<compile_context>
chip_gen: v6e
topology: v6e:2x2x1
jax: 0.10.0
libtpu: 0.0.40
codegen_flags: <defaults>
</compile_context>

<pallas_src>
import functools

import jax
import jax.numpy as jnp
from jax.experimental import pallas as pl
from jax.experimental.pallas import tpu as pltpu


# ---------------------------------------------------------------------------
# Kernels
# ---------------------------------------------------------------------------

def _block_diag_kernel(x_ref, w_ref, o_ref, *, compute_dtype):
    """x_ref: (TB, G*din)  w_ref: (G*din, G*dout)  o_ref: (TB, G*dout)."""
    o_ref[...] = jnp.dot(
        x_ref[...].astype(compute_dtype),
        w_ref[...],
        preferred_element_type=jnp.float32,
    ).astype(o_ref.dtype)


def _grouped_kernel(x_ref, w_ref, o_ref, *, compute_dtype):
    """x_ref: (TB, G, din)  w_ref: (G, din, dout)  o_ref: (TB, G, dout)."""
    # Permute the batch tile to block-major inside VMEM (no extra HBM traffic).
    x_gbd = pltpu.einshape("bgd->gbd", x_ref[...]).astype(compute_dtype)
    # Weights are DMA'd into VMEM once (constant index map); cast them here
    # instead of a wrapper-side astype so f32 parameters cross HBM only once.
    w = w_ref[...].astype(compute_dtype)
    acc = jnp.einsum("gbd,gdo->gbo", x_gbd, w,
                     preferred_element_type=jnp.float32)
    # Cast *before* the transpose-back so the relayout moves the narrower dtype.
    o_ref[...] = pltpu.einshape("gbo->bgo", acc.astype(o_ref.dtype))


# ---------------------------------------------------------------------------
# Sizing helpers
# ---------------------------------------------------------------------------

def _vmem_budget():
    """Generation-aware (working-set budget, vmem_limit_bytes)."""
    try:
        cap = int(pltpu.get_tpu_info().vmem_capacity_bytes)
    except Exception:
        cap = 64 << 20  # conservative (v7x-sized) fallback
    # 128-MiB parts (v5e/v6e): ~96 MiB budget / ~108 MiB limit.
    #  64-MiB parts (v7x):     ~36 MiB budget /  ~48 MiB limit.
    budget = max(min(cap - (28 << 20), (cap * 3) // 4), 16 << 20)
    limit = max(min(cap - (16 << 20), (cap * 85) // 100), budget + (8 << 20))
    return budget, limit


def _choose_batch_tile(batch, per_row_bytes, resident_bytes, vmem_budget_bytes,
                       *, min_grid_steps=4, max_tile=1024):
    """Largest aligned batch tile whose working set fits the VMEM budget."""
    avail = max(vmem_budget_bytes - resident_bytes, per_row_bytes)
    tb = int(min(avail // per_row_bytes, batch, max_tile))
    # Keep >= min_grid_steps grid steps so v7x's two TensorCores both get work
    # and the software pipeline has DMA to overlap on every generation.
    if batch >= min_grid_steps * 8:
        tb = min(tb, -(-batch // min_grid_steps))
    # (8,128) rule on the second-minor dim; 16-alignment keeps bf16 sublane
    # packing dense after any in-kernel relayout.
    if tb >= 128:
        tb -= tb % 128
    elif tb >= 16:
        tb -= tb % 16
    elif batch >= 8:
        tb = 8
    else:
        tb = batch
    return max(tb, 1)


def _weight_block_spec(block_shape, index_map, pipeline_mode):
    if pipeline_mode is None:
        return pl.BlockSpec(block_shape, index_map)
    return pl.BlockSpec(block_shape, index_map, pipeline_mode=pipeline_mode)


def _run_single_buffered_weights(run):
    """Prefer single-buffered resident weights (constant index_map -> the block
    never changes, so double-buffering only wastes VMEM).  Fall back to the
    default pipeline if this Pallas build rejects pl.Buffered(1)."""
    try:
        return run(pl.Buffered(1))
    except Exception:
        # TODO(synk): drop fallback once pl.Buffered(1) is guaranteed available.
        return run(None)


# ---------------------------------------------------------------------------
# Execution paths
# ---------------------------------------------------------------------------

def _block_diag_path(x, w, *, compute_dtype, out_dtype, batch_tile,
                     vmem_budget, vmem_limit):
    batch, num_blocks, din = x.shape
    dout = w.shape[-1]
    fin, fout = num_blocks * din, num_blocks * dout

    # Pack per-group weights into one block-diagonal compute-dtype matrix.
    # Single fused op (f32 parameter read from HBM once); in a real model this
    # would be cached / stored persistently.
    w_bd = (jnp.eye(num_blocks, dtype=compute_dtype)[:, None, :, None]
            * w.astype(compute_dtype)[:, :, None, :]).reshape(fin, fout)
    # Lane-dense 2-D views: contiguous dim merges, no data movement.
    x2 = x.reshape(batch, fin)

    io_item = jnp.dtype(x.dtype).itemsize
    out_item = jnp.dtype(out_dtype).itemsize
    cd_item = jnp.dtype(compute_dtype).itemsize

    resident = fin * fout * cd_item                       # single-buffered weights
    per_row = (2 * io_item * fin + 2 * out_item * fout    # double-buffered x / out
               + cd_item * fin                            # in-kernel cast of x
               + 4 * fout)                                # f32 matmul accumulator
    tb = batch_tile or _choose_batch_tile(batch, per_row, resident, vmem_budget)
    grid = (pl.cdiv(batch, tb),)

    cost = pl.CostEstimate(
        flops=2 * batch * fin * fout,                     # includes the zero blocks
        transcendentals=0,
        bytes_accessed=int(x2.size) * io_item + int(w_bd.size) * cd_item
        + batch * fout * out_item,
    )
    kernel = functools.partial(_block_diag_kernel, compute_dtype=compute_dtype)

    def run(w_pipeline_mode):
        return pl.pallas_call(
            kernel,
            out_shape=jax.ShapeDtypeStruct((batch, fout), out_dtype),
            grid_spec=pltpu.PrefetchScalarGridSpec(
                num_scalar_prefetch=0,
                grid=grid,
                in_specs=[
                    pl.BlockSpec((tb, fin), lambda t: (t, 0)),
                    _weight_block_spec((fin, fout), lambda t: (0, 0),
                                       w_pipeline_mode),
                ],
                out_specs=pl.BlockSpec((tb, fout), lambda t: (t, 0)),
            ),
            compiler_params=pltpu.CompilerParams(
                dimension_semantics=("parallel",),
                vmem_limit_bytes=vmem_limit,
            ),
            cost_estimate=cost,
        )(x2, w_bd)

    out2 = _run_single_buffered_weights(run)
    return out2.reshape(batch, num_blocks, dout)


def _grouped_path(x, w, *, compute_dtype, out_dtype, batch_tile,
                  vmem_budget, vmem_limit):
    batch, num_blocks, din = x.shape
    dout = w.shape[-1]

    io_item = jnp.dtype(x.dtype).itemsize
    out_item = jnp.dtype(out_dtype).itemsize
    cd_item = jnp.dtype(compute_dtype).itemsize
    w_item = jnp.dtype(w.dtype).itemsize

    # Resident weights: single-buffered original-dtype block + in-kernel cast.
    resident = num_blocks * din * dout * (w_item + cd_item)
    if resident > (vmem_budget * 3) // 4:
        # TODO(synk): add din (K) / num_blocks tiling with a pl.when-managed
        # f32 accumulator for weights too large to stay resident in VMEM.
        raise NotImplementedError(
            f"GroupLinearLayer weights too large for resident-VMEM kernel "
            f"({resident} bytes vs budget {vmem_budget}).")

    per_row = (2 * io_item * num_blocks * (din + dout)    # double-buffered x / out
               + 2 * cd_item * num_blocks * din           # relayout + cast copies of x
               + 4 * num_blocks * dout                    # f32 accumulator
               + 2 * out_item * num_blocks * dout)        # cast + relayout-back staging
    tb = batch_tile or _choose_batch_tile(batch, per_row, resident, vmem_budget)
    grid = (pl.cdiv(batch, tb),)

    cost = pl.CostEstimate(
        flops=2 * batch * num_blocks * din * dout,
        transcendentals=0,
        bytes_accessed=int(x.size) * io_item + int(w.size) * w_item
        + batch * num_blocks * dout * out_item,
    )
    kernel = functools.partial(_grouped_kernel, compute_dtype=compute_dtype)

    def run(w_pipeline_mode):
        return pl.pallas_call(
            kernel,
            out_shape=jax.ShapeDtypeStruct((batch, num_blocks, dout), out_dtype),
            grid_spec=pltpu.PrefetchScalarGridSpec(
                num_scalar_prefetch=0,
                grid=grid,
                in_specs=[
                    pl.BlockSpec((tb, num_blocks, din), lambda t: (t, 0, 0)),
                    _weight_block_spec((num_blocks, din, dout),
                                       lambda t: (0, 0, 0), w_pipeline_mode),
                ],
                out_specs=pl.BlockSpec((tb, num_blocks, dout),
                                       lambda t: (t, 0, 0)),
            ),
            compiler_params=pltpu.CompilerParams(
                dimension_semantics=("parallel",),
                vmem_limit_bytes=vmem_limit,
            ),
            cost_estimate=cost,
        )(x, w)

    return _run_single_buffered_weights(run)


# ---------------------------------------------------------------------------
# Public wrapper
# ---------------------------------------------------------------------------

def group_linear_layer(x, w, *, compute_dtype=jnp.bfloat16, batch_tile=None,
                       mode="auto"):
    """GroupLinearLayer forward: out[b, g] = x[b, g] @ w[g].

    x: (batch, num_blocks, din); w: (num_blocks, din, dout).
    Returns (batch, num_blocks, dout) in the promoted dtype of (x, w),
    matching the PyTorch `permute -> bmm -> permute` forward.

    Precision contract: MXU inputs are cast to `compute_dtype` (default
    bfloat16) with float32 accumulation, so results carry bf16-level error
    versus an f32 torch.bmm; pass `compute_dtype=jnp.float32` for full f32.
    The kernel is HBM-bound at typical RIM shapes, so passing x (and w) in
    bfloat16 roughly halves its wall-clock on v5e/v6e.

    mode: "auto" | "block_diag" | "grouped".
    """
    batch, num_blocks, din = x.shape
    nb_w, din_w, dout = w.shape
    assert nb_w == num_blocks and din_w == din
    assert mode in ("auto", "block_diag", "grouped")

    out_dtype = jnp.promote_types(x.dtype, w.dtype)
    vmem_budget, vmem_limit = _vmem_budget()

    cd_item = jnp.dtype(compute_dtype).itemsize
    bd_bytes = (num_blocks * din) * (num_blocks * dout) * cd_item
    use_block_diag = mode == "block_diag" or (
        mode == "auto"
        and bd_bytes <= vmem_budget // 2
        and din <= 256 and dout <= 256 and num_blocks <= 16)

    path = _block_diag_path if use_block_diag else _grouped_path
    return path(x, w, compute_dtype=compute_dtype, out_dtype=out_dtype,
                batch_tile=batch_tile, vmem_budget=vmem_budget,
                vmem_limit=vmem_limit)


if __name__ == "__main__":
    # Small shapes consistent with the module's forward: x (batch, num_blocks, din)
    batch, num_blocks, din, dout = 2, 4, 32, 32

    key = jax.random.PRNGKey(0)
    kx, kw = jax.random.split(key)

    x = jax.random.normal(kx, (batch, num_blocks, din), dtype=jnp.float32)
    # Deterministic parameter init mirroring nn.Parameter(0.01 * torch.randn(...))
    w = 0.01 * jax.random.normal(kw, (num_blocks, din, dout), dtype=jnp.float32)

    # Reference (same math as the torch.bmm path).
    ref = jnp.einsum("bnd,ndo->bno", x, w)

    # Exercise both execution paths (block-diagonal dense path is the default
    # for these shapes; grouped path is the large-shape fallback).
    for m in ("block_diag", "grouped"):
        out = jax.block_until_ready(group_linear_layer(x, w, mode=m))
        assert out.shape == (batch, num_blocks, dout)
        assert out.dtype == ref.dtype
        err = float(jnp.max(jnp.abs(out - ref)))
        assert jnp.allclose(out, ref, atol=5e-3, rtol=5e-2), (m, err)

    print("KERNEL_OK")
</pallas_src>

<mosaic_0001>
module attributes {stable_mosaic.version = 11 : i64} {
  func.func @_block_diag_kernel(%arg0: i32, %arg1: memref<2x128xf32, #tpu.memory_space<vmem>>, %arg2: memref<128x128xbf16, #tpu.memory_space<vmem>>, %arg3: memref<2x128xf32, #tpu.memory_space<vmem>>) attributes {dimension_semantics = [#tpu.dimension_semantics<parallel>], iteration_bounds = array<i64: 1>, scalar_prefetch = 0 : i64, scratch_operands = 0 : i64, tpu.core_type = #tpu.core_type<tc>, window_params = [{transform_indices = @transform_0, window_bounds = array<i64: 2, 128>}, {pipeline_mode = #tpu.pipeline_mode<synchronous>, transform_indices = @transform_1, window_bounds = array<i64: 128, 128>}, {transform_indices = @transform_2, window_bounds = array<i64: 2, 128>}]} {
    %c0 = arith.constant 0 : index
    %c0_0 = arith.constant 0 : index
    %0 = vector.load %arg1[%c0, %c0_0] : memref<2x128xf32, #tpu.memory_space<vmem>>, vector<2x128xf32>
    %1 = arith.truncf %0 : vector<2x128xf32> to vector<2x128xbf16>
    %c0_1 = arith.constant 0 : index
    %c0_2 = arith.constant 0 : index
    %2 = vector.load %arg2[%c0_1, %c0_2] : memref<128x128xbf16, #tpu.memory_space<vmem>>, vector<128x128xbf16>
    %cst = arith.constant dense<0.000000e+00> : vector<2x128xf32>
    %3 = tpu.matmul %1, %2, %cst {dimension_numbers = #tpu.dot_dimension_numbers<[1], [0], [0], [1], [0, 0, 1, 1], [], []>} : vector<2x128xbf16>, vector<128x128xbf16>, vector<2x128xf32> -> vector<2x128xf32>
    %c0_3 = arith.constant 0 : index
    %c0_4 = arith.constant 0 : index
    %4 = vector.load %arg3[%c0_3, %c0_4] : memref<2x128xf32, #tpu.memory_space<vmem>>, vector<2x128xf32>
    tpu.vector_store %arg3[%c0_3, %c0_4], %3 {strides = array<i32>} : memref<2x128xf32, #tpu.memory_space<vmem>>, vector<2x128xf32>,
    return
  }
  func.func @transform_0(%arg0: i32) -> (i32, i32) {
    %c0_i32 = arith.constant 0 : i32
    %c0_i32_0 = arith.constant 0 : i32
    return %arg0, %c0_i32 : i32, i32
  }
  func.func @transform_1(%arg0: i32) -> (i32, i32) {
    %c0_i32 = arith.constant 0 : i32
    %c0_i32_0 = arith.constant 0 : i32
    %c0_i32_1 = arith.constant 0 : i32
    return %c0_i32, %c0_i32_0 : i32, i32
  }
  func.func @transform_2(%arg0: i32) -> (i32, i32) {
    %c0_i32 = arith.constant 0 : i32
    %c0_i32_0 = arith.constant 0 : i32
    return %arg0, %c0_i32 : i32, i32
  }
}

module attributes {stable_mosaic.version = 11 : i64} {
  func.func @_block_diag_kernel(%arg0: i32, %arg1: memref<2x128xf32, #tpu.memory_space<vmem>>, %arg2: memref<128x128xbf16, #tpu.memory_space<vmem>>, %arg3: memref<2x128xf32, #tpu.memory_space<vmem>>) attributes {dimension_semantics = [#tpu.dimension_semantics<parallel>], iteration_bounds = array<i64: 1>, scalar_prefetch = 0 : i64, scratch_operands = 0 : i64, tpu.core_type = #tpu.core_type<tc>, window_params = [{transform_indices = @transform_0, window_bounds = array<i64: 2, 128>}, {pipeline_mode = #tpu.pipeline_mode<synchronous>, transform_indices = @transform_1, window_bounds = array<i64: 128, 128>}, {transform_indices = @transform_2, window_bounds = array<i64: 2, 128>}]} {
    %c0 = arith.constant 0 : index
    %c0_0 = arith.constant 0 : index
    %0 = vector.load %arg1[%c0, %c0_0] : memref<2x128xf32, #tpu.memory_space<vmem>>, vector<2x128xf32>
    %1 = arith.truncf %0 : vector<2x128xf32> to vector<2x128xbf16>
    %c0_1 = arith.constant 0 : index
    %c0_2 = arith.constant 0 : index
    %2 = vector.load %arg2[%c0_1, %c0_2] : memref<128x128xbf16, #tpu.memory_space<vmem>>, vector<128x128xbf16>
    %cst = arith.constant dense<0.000000e+00> : vector<2x128xf32>
    %3 = tpu.matmul %1, %2, %cst {dimension_numbers = #tpu.dot_dimension_numbers<[1], [0], [0], [1], [0, 0, 1, 1], [], []>} : vector<2x128xbf16>, vector<128x128xbf16>, vector<2x128xf32> -> vector<2x128xf32>
    %c0_3 = arith.constant 0 : index
    %c0_4 = arith.constant 0 : index
    %4 = vector.load %arg3[%c0_3, %c0_4] : memref<2x128xf32, #tpu.memory_space<vmem>>, vector<2x128xf32>
    tpu.vector_store %arg3[%c0_3, %c0_4], %3 {strides = array<i32>} : memref<2x128xf32, #tpu.memory_space<vmem>>, vector<2x128xf32>,
    return
  }
  func.func @transform_0(%arg0: i32) -> (i32, i32) {
    %c0_i32 = arith.constant 0 : i32
    %c0_i32_0 = arith.constant 0 : i32
    return %arg0, %c0_i32 : i32, i32
  }
  func.func @transform_1(%arg0: i32) -> (i32, i32) {
    %c0_i32 = arith.constant 0 : i32
    %c0_i32_0 = arith.constant 0 : i32
    %c0_i32_1 = arith.constant 0 : i32
    return %c0_i32, %c0_i32_0 : i32, i32
  }
  func.func @transform_2(%arg0: i32) -> (i32, i32) {
    %c0_i32 = arith.constant 0 : i32
    %c0_i32_0 = arith.constant 0 : i32
    return %arg0, %c0_i32 : i32, i32
  }
}

</mosaic_0001>

<llo_original>
// kernel: tpu_custom_call.1
$region0: #{tpu_custom_call.1}
  #allocation0 [shape = 'u32[]', space=smem, size = 0x4, offset = 0x4, fixed_abs, tag = 'smem constant byte address 0x4 - core index']
  #allocation1 [shape = 'u32[144,128]{1,0:T(1,128)}', space=vmem, size = 0x12000, scoped, tag = 'internal scratch']
  %s0 = inlined_call_operand.hbm [shape: f32[2,128], index: 0, kind: input, shape index: {}]
  %s1 = inlined_call_operand.hbm [shape: bf16[128,128], index: 1, kind: input, shape index: {}]
  %s2 = inlined_call_operand.hbm [shape: f32[2,128], index: 2, kind: output, shape index: {}]
  %s3 = sld [smem:[#allocation0]]
  $region26: #{tpu_custom_call.1} parent=0
    _
  %s5 = ssub.s32 1, %s3
  %s6 = scalar_select 0, %s5, %s3
  $region1: #{tpu_custom_call.1} parent=0
    #allocation2 [shape = 'u8[1024]{0}', space=vmem, size = 0x400, scoped, tag = 'input window, operand 0, single buffered']
    #allocation3 [shape = 's32[1]{0}', space=sflag, size = 0x4, scoped, tag = 'scoped memory for tpu_custom_call.1']
    #allocation4 [shape = 's32[1]{0}', space=sflag, size = 0x4, scoped, tag = 'scoped memory for tpu_custom_call.1']
    #allocation5 [shape = 'u8[32768]{0}', space=vmem, size = 0x8000, scoped, tag = 'input window, operand 1, single buffered']
    #allocation6 [shape = 's32[1]{0}', space=sflag, size = 0x4, scoped, tag = 'scoped memory for tpu_custom_call.1']
    #allocation7 [shape = 'u8[1024]{0}', space=vmem, size = 0x400, scoped, tag = 'output window, operand 0, single buffered']
    %7 = vsyncpa [#allocation3], 0
    %8 = vsyncpa [#allocation6], 0
    %9 = vsyncpa [#allocation4], 0
    // Predicated region
    $region2: #{tpu_custom_call.1} parent=1 // pred_check
      _
    $region3: #{tpu_custom_call.1} parent=1 // pred_check_branch
      %11 = sbr.rel (0) target = $region5
    $region4: #{tpu_custom_call.1} parent=1 // pred_region
      %s13 = ssub.s32 32, 32
      %14 = vsyncadd [#allocation3], %s13
      %s16 = sshll.u32 [#allocation2], 4
      %s17 = int_to_ptr.vmem [resolvable:$true] %s16
      %19 = dma.hbm_to_vmem [thread:$0]  %s0, 32, %s17, [#allocation3]
    $region5: #{tpu_custom_call.1} parent=1 // pred_fallthru
      _
    // Predicated region
    $region6: #{tpu_custom_call.1} parent=1 // pred_check
      _
    $region7: #{tpu_custom_call.1} parent=1 // pred_check_branch
      %21 = sbr.rel (0) target = $region9
    $region8: #{tpu_custom_call.1} parent=1 // pred_region
      %s23 = ssub.s32 1024, 1024
      %24 = vsyncadd [#allocation6], %s23
      %s25 = sshll.u32 [#allocation5], 4
      %s26 = int_to_ptr.vmem [resolvable:$true] %s25
      %31 = dma.hbm_to_vmem [thread:$0]  %s1, 1024, %s26, [#allocation6], 64, 64, 4
    $region9: #{tpu_custom_call.1} parent=1 // pred_fallthru
      _
    // Predicated region
    $region10: #{tpu_custom_call.1} parent=1 // pred_check
      _
    $region11: #{tpu_custom_call.1} parent=1 // pred_check_branch
      %33 = sbr.rel (0) target = $region13
    $region12: #{tpu_custom_call.1} parent=1 // pred_region
      %34 = dma.done [#allocation3], 32
    $region13: #{tpu_custom_call.1} parent=1 // pred_fallthru
      _
    // Predicated region
    $region14: #{tpu_custom_call.1} parent=1 // pred_check
      _
    $region15: #{tpu_custom_call.1} parent=1 // pred_check_branch
      %36 = sbr.rel (0) target = $region17
    $region16: #{tpu_custom_call.1} parent=1 // pred_region
      %37 = dma.done [#allocation6], 1024
    $region17: #{tpu_custom_call.1} parent=1 // pred_fallthru
      _
    %v39 = vld [vmem:[#allocation2] sm:$0x3]
    %v40 = vpack.c.bf16 %v39, %v39
    %v41 = vld [vmem:[#allocation5] sm:$0xf]
    %v42 = vld [vmem:[#allocation5 + $0x4] sm:$0xf]
    %v43 = vld [vmem:[#allocation5 + $0x8] sm:$0xf]
    %v44 = vld [vmem:[#allocation5 + $0xc] sm:$0xf]
    %v45 = vld [vmem:[#allocation5 + $0x10] sm:$0xf]
    %v46 = vld [vmem:[#allocation5 + $0x14] sm:$0xf]
    %v47 = vld [vmem:[#allocation5 + $0x18] sm:$0xf]
    %v48 = vld [vmem:[#allocation5 + $0x1c] sm:$0xf]
    %v49 = vld [vmem:[#allocation5 + $0x20] sm:$0xf]
    %v50 = vld [vmem:[#allocation5 + $0x24] sm:$0xf]
    %v51 = vld [vmem:[#allocation5 + $0x28] sm:$0xf]
    %v52 = vld [vmem:[#allocation5 + $0x2c] sm:$0xf]
    %v53 = vld [vmem:[#allocation5 + $0x30] sm:$0xf]
    %v54 = vld [vmem:[#allocation5 + $0x34] sm:$0xf]
    %v55 = vld [vmem:[#allocation5 + $0x38] sm:$0xf]
    %v56 = vld [vmem:[#allocation5 + $0x3c] sm:$0xf]
    %v73 = vunpack.c.l.b16 %v41
    %v74 = vunpack.c.l.b16 %v42
    %v75 = vunpack.c.l.b16 %v43
    %v76 = vunpack.c.l.b16 %v44
    %v77 = vunpack.c.l.b16 %v45
    %v78 = vunpack.c.l.b16 %v46
    %v79 = vunpack.c.l.b16 %v47
    %v80 = vunpack.c.l.b16 %v48
    %v81 = vunpack.c.l.b16 %v49
    %v82 = vunpack.c.l.b16 %v50
    %v83 = vunpack.c.l.b16 %v51
    %v84 = vunpack.c.l.b16 %v52
    %v85 = vunpack.c.l.b16 %v53
    %v86 = vunpack.c.l.b16 %v54
    %v87 = vunpack.c.l.b16 %v55
    %v88 = vunpack.c.l.b16 %v56
    %v89 = vpack.c.b16 %v74, %v73
    %v90 = vpack.c.b16 %v76, %v75
    %v91 = vpack.c.b16 %v78, %v77
    %v92 = vpack.c.b16 %v80, %v79
    %v93 = vpack.c.b16 %v82, %v81
    %v94 = vpack.c.b16 %v84, %v83
    %v95 = vpack.c.b16 %v86, %v85
    %v96 = vpack.c.b16 %v88, %v87
    %105 = vmatprep.subr.bf16.mxu0 0
    %106 = vmatpush1.bf16.msra.mxu0 %v96
    %107 = vmatprep.subr.bf16.mxu0 0
    %108 = vmatpush1.bf16.msra.mxu0 %v95
    %109 = vmatprep.subr.bf16.mxu0 0
    %110 = vmatpush1.bf16.msra.mxu0 %v94
    %111 = vmatprep.subr.bf16.mxu0 0
    %112 = vmatpush1.bf16.msra.mxu0 %v93
    %113 = vmatprep.subr.bf16.mxu0 0
    %114 = vmatpush1.bf16.msra.mxu0 %v92
    %115 = vmatprep.subr.bf16.mxu0 0
    %116 = vmatpush1.bf16.msra.mxu0 %v91
    %117 = vmatprep.subr.bf16.mxu0 0
    %118 = vmatpush1.bf16.msra.mxu0 %v90
    %119 = vmatprep.subr.bf16.mxu0 0
    %120 = vmatpush1.bf16.msra.mxu0 %v89
    %121 = vmatprep.subr.bf16.mxu0 0
    %122 = vmatpush2.bf16.msra.mxu0 0
    %123 = vmatprep.subr.bf16.mxu0 0
    %124 = vmatpush2.bf16.msra.mxu0 0
    %125 = vmatprep.subr.bf16.mxu0 0
    %126 = vmatpush2.bf16.msra.mxu0 0
    %127 = vmatprep.subr.bf16.mxu0 0
    %128 = vmatpush2.bf16.msra.mxu0 0
    %129 = vmatprep.subr.bf16.mxu0 0
    %130 = vmatpush2.bf16.msra.mxu0 0
    %131 = vmatprep.subr.bf16.mxu0 0
    %132 = vmatpush2.bf16.msra.mxu0 0
    %133 = vmatprep.subr.bf16.mxu0 0
    %134 = vmatpush2.bf16.msra.mxu0 0
    %135 = vmatprep.subr.bf16.mxu0 0
    %136 = vmatpush2.bf16.msra.mxu0 0
    %137 = vmatprep.mubr.bf16.mxu0 0
    %138 = vmatmul.mubr.bf16.gmra.mxu0 %v40
    %v139 = vpop.f32.mrf.mxu0
    %v140 = vadd.f32 0.0, %v139
    %v141 = vpop.f32.mrf.mxu0
    %v142 = vpop.f32.mrf.mxu0
    %v143 = vpop.f32.mrf.mxu0
    %144 = vdwg.mxu0
    %145 = vst [vmem:[#allocation7] sm:$0x3] %v140
    // Predicated region
    $region18: #{tpu_custom_call.1} parent=1 // pred_check
      _
    $region19: #{tpu_custom_call.1} parent=1 // pred_check_branch
      %147 = sbr.rel (0) target = $region21
    $region20: #{tpu_custom_call.1} parent=1 // pred_region
      %s149 = ssub.s32 32, 32
      %150 = vsyncadd [#allocation4], %s149
      %s152 = sshll.u32 [#allocation7], 4
      %s153 = int_to_ptr.vmem [resolvable:$true] %s152
      %155 = dma.vmem_to_hbm [thread:$0]  %s153, 32, %s2, [#allocation4]
    $region21: #{tpu_custom_call.1} parent=1 // pred_fallthru
      _
    // Predicated region
    $region22: #{tpu_custom_call.1} parent=1 // pred_check
      _
    $region23: #{tpu_custom_call.1} parent=1 // pred_check_branch
      %157 = sbr.rel (0) target = $region25
    $region24: #{tpu_custom_call.1} parent=1 // pred_region
      %158 = dma.done [#allocation4], 32
    $region25: #{tpu_custom_call.1} parent=1 // pred_fallthru
      _
    %159 = vsyncpa [#allocation3], 1
    %160 = vsyncpa [#allocation6], 1
    %161 = vsyncpa [#allocation4], 1

// kernel: tpu_custom_call.1
$region0: #{tpu_custom_call.1}
  #allocation0 [shape = 'u32[]', space=smem, size = 0x4, offset = 0x4, fixed_abs, tag = 'smem constant byte address 0x4 - core index']
  #allocation1 [shape = 'u32[144,128]{1,0:T(1,128)}', space=vmem, size = 0x12000, scoped, tag = 'internal scratch']
  %s0 = inlined_call_operand.hbm [shape: f32[2,128], index: 0, kind: input, shape index: {}]
  %s1 = inlined_call_operand.hbm [shape: bf16[128,128], index: 1, kind: input, shape index: {}]
  %s2 = inlined_call_operand.hbm [shape: f32[2,128], index: 2, kind: output, shape index: {}]
  %s3 = sld [smem:[#allocation0]]
  $region26: #{tpu_custom_call.1} parent=0
    _
  %s5 = ssub.s32 1, %s3
  %s6 = scalar_select 0, %s5, %s3
  $region1: #{tpu_custom_call.1} parent=0
    #allocation2 [shape = 'u8[1024]{0}', space=vmem, size = 0x400, scoped, tag = 'input window, operand 0, single buffered']
    #allocation3 [shape = 's32[1]{0}', space=sflag, size = 0x4, scoped, tag = 'scoped memory for tpu_custom_call.1']
    #allocation4 [shape = 's32[1]{0}', space=sflag, size = 0x4, scoped, tag = 'scoped memory for tpu_custom_call.1']
    #allocation5 [shape = 'u8[32768]{0}', space=vmem, size = 0x8000, scoped, tag = 'input window, operand 1, single buffered']
    #allocation6 [shape = 's32[1]{0}', space=sflag, size = 0x4, scoped, tag = 'scoped memory for tpu_custom_call.1']
    #allocation7 [shape = 'u8[1024]{0}', space=vmem, size = 0x400, scoped, tag = 'output window, operand 0, single buffered']
    %7 = vsyncpa [#allocation3], 0
    %8 = vsyncpa [#allocation6], 0
    %9 = vsyncpa [#allocation4], 0
    // Predicated region
    $region2: #{tpu_custom_call.1} parent=1 // pred_check
      _
    $region3: #{tpu_custom_call.1} parent=1 // pred_check_branch
      %11 = sbr.rel (0) target = $region5
    $region4: #{tpu_custom_call.1} parent=1 // pred_region
      %s13 = ssub.s32 32, 32
      %14 = vsyncadd [#allocation3], %s13
      %s16 = sshll.u32 [#allocation2], 4
      %s17 = int_to_ptr.vmem [resolvable:$true] %s16
      %19 = dma.hbm_to_vmem [thread:$0]  %s0, 32, %s17, [#allocation3]
    $region5: #{tpu_custom_call.1} parent=1 // pred_fallthru
      _
    // Predicated region
    $region6: #{tpu_custom_call.1} parent=1 // pred_check
      _
    $region7: #{tpu_custom_call.1} parent=1 // pred_check_branch
      %21 = sbr.rel (0) target = $region9
    $region8: #{tpu_custom_call.1} parent=1 // pred_region
      %s23 = ssub.s32 1024, 1024
      %24 = vsyncadd [#allocation6], %s23
      %s25 = sshll.u32 [#allocation5], 4
      %s26 = int_to_ptr.vmem [resolvable:$true] %s25
      %31 = dma.hbm_to_vmem [thread:$0]  %s1, 1024, %s26, [#allocation6], 64, 64, 4
    $region9: #{tpu_custom_call.1} parent=1 // pred_fallthru
      _
    // Predicated region
    $region10: #{tpu_custom_call.1} parent=1 // pred_check
      _
    $region11: #{tpu_custom_call.1} parent=1 // pred_check_branch
      %33 = sbr.rel (0) target = $region13
    $region12: #{tpu_custom_call.1} parent=1 // pred_region
      %34 = dma.done [#allocation3], 32
    $region13: #{tpu_custom_call.1} parent=1 // pred_fallthru
      _
    // Predicated region
    $region14: #{tpu_custom_call.1} parent=1 // pred_check
      _
    $region15: #{tpu_custom_call.1} parent=1 // pred_check_branch
      %36 = sbr.rel (0) target = $region17
    $region16: #{tpu_custom_call.1} parent=1 // pred_region
      %37 = dma.done [#allocation6], 1024
    $region17: #{tpu_custom_call.1} parent=1 // pred_fallthru
      _
    %v39 = vld [vmem:[#allocation2] sm:$0x3]
    %v40 = vpack.c.bf16 %v39, %v39
    %v41 = vld [vmem:[#allocation5] sm:$0xf]
    %v42 = vld [vmem:[#allocation5 + $0x4] sm:$0xf]
    %v43 = vld [vmem:[#allocation5 + $0x8] sm:$0xf]
    %v44 = vld [vmem:[#allocation5 + $0xc] sm:$0xf]
    %v45 = vld [vmem:[#allocation5 + $0x10] sm:$0xf]
    %v46 = vld [vmem:[#allocation5 + $0x14] sm:$0xf]
    %v47 = vld [vmem:[#allocation5 + $0x18] sm:$0xf]
    %v48 = vld [vmem:[#allocation5 + $0x1c] sm:$0xf]
    %v49 = vld [vmem:[#allocation5 + $0x20] sm:$0xf]
    %v50 = vld [vmem:[#allocation5 + $0x24] sm:$0xf]
    %v51 = vld [vmem:[#allocation5 + $0x28] sm:$0xf]
    %v52 = vld [vmem:[#allocation5 + $0x2c] sm:$0xf]
    %v53 = vld [vmem:[#allocation5 + $0x30] sm:$0xf]
    %v54 = vld [vmem:[#allocation5 + $0x34] sm:$0xf]
    %v55 = vld [vmem:[#allocation5 + $0x38] sm:$0xf]
    %v56 = vld [vmem:[#allocation5 + $0x3c] sm:$0xf]
    %v73 = vunpack.c.l.b16 %v41
    %v74 = vunpack.c.l.b16 %v42
    %v75 = vunpack.c.l.b16 %v43
    %v76 = vunpack.c.l.b16 %v44
    %v77 = vunpack.c.l.b16 %v45
    %v78 = vunpack.c.l.b16 %v46
    %v79 = vunpack.c.l.b16 %v47
    %v80 = vunpack.c.l.b16 %v48
    %v81 = vunpack.c.l.b16 %v49
    %v82 = vunpack.c.l.b16 %v50
    %v83 = vunpack.c.l.b16 %v51
    %v84 = vunpack.c.l.b16 %v52
    %v85 = vunpack.c.l.b16 %v53
    %v86 = vunpack.c.l.b16 %v54
    %v87 = vunpack.c.l.b16 %v55
    %v88 = vunpack.c.l.b16 %v56
    %v89 = vpack.c.b16 %v74, %v73
    %v90 = vpack.c.b16 %v76, %v75
    %v91 = vpack.c.b16 %v78, %v77
    %v92 = vpack.c.b16 %v80, %v79
    %v93 = vpack.c.b16 %v82, %v81
    %v94 = vpack.c.b16 %v84, %v83
    %v95 = vpack.c.b16 %v86, %v85
    %v96 = vpack.c.b16 %v88, %v87
    %105 = vmatprep.subr.bf16.mxu0 0
    %106 = vmatpush1.bf16.msra.mxu0 %v96
    %107 = vmatprep.subr.bf16.mxu0 0
    %108 = vmatpush1.bf16.msra.mxu0 %v95
    %109 = vmatprep.subr.bf16.mxu0 0
    %110 = vmatpush1.bf16.msra.mxu0 %v94
    %111 = vmatprep.subr.bf16.mxu0 0
    %112 = vmatpush1.bf16.msra.mxu0 %v93
    %113 = vmatprep.subr.bf16.mxu0 0
    %114 = vmatpush1.bf16.msra.mxu0 %v92
    %115 = vmatprep.subr.bf16.mxu0 0
    %116 = vmatpush1.bf16.msra.mxu0 %v91
    %117 = vmatprep.subr.bf16.mxu0 0
    %118 = vmatpush1.bf16.msra.mxu0 %v90
    %119 = vmatprep.subr.bf16.mxu0 0
    %120 = vmatpush1.bf16.msra.mxu0 %v89
    %121 = vmatprep.subr.bf16.mxu0 0
    %122 = vmatpush2.bf16.msra.mxu0 0
    %123 = vmatprep.subr.bf16.mxu0 0
    %124 = vmatpush2.bf16.msra.mxu0 0
    %125 = vmatprep.subr.bf16.mxu0 0
    %126 = vmatpush2.bf16.msra.mxu0 0
    %127 = vmatprep.subr.bf16.mxu0 0
    %128 = vmatpush2.bf16.msra.mxu0 0
    %129 = vmatprep.subr.bf16.mxu0 0
    %130 = vmatpush2.bf16.msra.mxu0 0
    %131 = vmatprep.subr.bf16.mxu0 0
    %132 = vmatpush2.bf16.msra.mxu0 0
    %133 = vmatprep.subr.bf16.mxu0 0
    %134 = vmatpush2.bf16.msra.mxu0 0
    %135 = vmatprep.subr.bf16.mxu0 0
    %136 = vmatpush2.bf16.msra.mxu0 0
    %137 = vmatprep.mubr.bf16.mxu0 0
    %138 = vmatmul.mubr.bf16.gmra.mxu0 %v40
    %v139 = vpop.f32.mrf.mxu0
    %v140 = vadd.f32 0.0, %v139
    %v141 = vpop.f32.mrf.mxu0
    %v142 = vpop.f32.mrf.mxu0
    %v143 = vpop.f32.mrf.mxu0
    %144 = vdwg.mxu0
    %145 = vst [vmem:[#allocation7] sm:$0x3] %v140
    // Predicated region
    $region18: #{tpu_custom_call.1} parent=1 // pred_check
      _
    $region19: #{tpu_custom_call.1} parent=1 // pred_check_branch
      %147 = sbr.rel (0) target = $region21
    $region20: #{tpu_custom_call.1} parent=1 // pred_region
      %s149 = ssub.s32 32, 32
      %150 = vsyncadd [#allocation4], %s149
      %s152 = sshll.u32 [#allocation7], 4
      %s153 = int_to_ptr.vmem [resolvable:$true] %s152
      %155 = dma.vmem_to_hbm [thread:$0]  %s153, 32, %s2, [#allocation4]
    $region21: #{tpu_custom_call.1} parent=1 // pred_fallthru
      _
    // Predicated region
    $region22: #{tpu_custom_call.1} parent=1 // pred_check
      _
    $region23: #{tpu_custom_call.1} parent=1 // pred_check_branch
      %157 = sbr.rel (0) target = $region25
    $region24: #{tpu_custom_call.1} parent=1 // pred_region
      %158 = dma.done [#allocation4], 32
    $region25: #{tpu_custom_call.1} parent=1 // pred_fallthru
      _
    %159 = vsyncpa [#allocation3], 1
    %160 = vsyncpa [#allocation6], 1
    %161 = vsyncpa [#allocation4], 1

</llo_original>
